<compile_context>
chip_gen: v6e
topology: v6e:2x2x1
jax: 0.10.0
libtpu: 0.0.40
codegen_flags: <defaults>
</compile_context>

<pallas_src>
import functools

import jax
import jax.numpy as jnp
from jax.experimental import pallas as pl
from jax.experimental.pallas import tpu as pltpu

LANE = 128  # vreg lane width / MXU edge alignment for hidden features


def _round_up(x: int, m: int) -> int:
    return (x + m - 1) // m * m


def _make_mlp_kernel(num_hidden_layers: int, use_activation: bool, compute_dtype):
    """kernel(x_ref, w0, b0, ..., w_out, b_out, o_ref): fused MLP on one row tile."""

    def kernel(*refs):
        x_ref = refs[0]
        o_ref = refs[-1]
        p = refs[1:-1]

        h = x_ref[...].astype(compute_dtype)            # bf16 operands for the MXU
        idx = 0
        for _ in range(num_hidden_layers):
            w = p[idx][...]                             # bf16 (in_p, units_p)
            b = p[idx + 1][...]                         # f32  (1, units_p)
            idx += 2
            h32 = jnp.dot(h, w, preferred_element_type=jnp.float32) + b
            if use_activation:
                h32 = jnp.maximum(h32, 0.0)             # nn.ReLU(), in f32
            h = h32.astype(compute_dtype)
        w = p[idx][...]                                 # bf16 (units_p, output_dim)
        b = p[idx + 1][...]                             # f32  (1, output_dim)
        out = jnp.dot(h, w, preferred_element_type=jnp.float32) + b
        o_ref[...] = out.astype(o_ref.dtype)            # exact-width store, no dead columns

    return kernel


def init_mlp_params(key, input_dim, layers, units, output_dim, dtype=jnp.float32):
    """Deterministic synthetic parameters (same shapes as the torch module)."""
    params = []
    in_size = input_dim
    for _ in range(layers):
        key, kw, kb = jax.random.split(key, 3)
        scale = 1.0 / jnp.sqrt(jnp.asarray(in_size, jnp.float32))
        params.append((jax.random.normal(kw, (in_size, units), dtype) * scale).astype(dtype))
        params.append((jax.random.normal(kb, (1, units), dtype) * scale).astype(dtype))
        in_size = units
    key, kw, kb = jax.random.split(key, 3)
    scale = 1.0 / jnp.sqrt(jnp.asarray(units, jnp.float32))
    params.append((jax.random.normal(kw, (units, output_dim), dtype) * scale).astype(dtype))
    params.append((jax.random.normal(kb, (1, output_dim), dtype) * scale).astype(dtype))
    return params


def _prepare_params(params, layers, compute_dtype):
    """Hidden layers: zero-pad the output-feature dim up to a multiple of 128
    lanes (lane-dense N edge, and a dense K edge for the following layer).
    Final layer: keep the exact output_dim so HBM writeback is exact.
    Weights are cast to the MXU compute dtype; biases stay f32.  Zero padding
    leaves the math unchanged (padded columns are 0 through ReLU and
    contribute 0 downstream)."""
    prepared = []
    prev_out_p = None
    for li in range(layers + 1):
        w = params[2 * li]
        b = params[2 * li + 1]
        in_dim, out_dim = w.shape
        in_p = in_dim if prev_out_p is None else prev_out_p   # match previous padded cols
        out_p = _round_up(out_dim, LANE) if li < layers else out_dim
        w_p = jnp.zeros((in_p, out_p), compute_dtype).at[:in_dim, :out_dim].set(
            w.astype(compute_dtype))
        b_p = jnp.zeros((1, out_p), jnp.float32).at[:, :out_dim].set(
            b.astype(jnp.float32))
        prepared += [w_p, b_p]
        prev_out_p = out_p
    return prepared


def _default_vmem_limit_bytes():
    """Per-generation VMEM budget: ~85% of physical (v5e/v6e: 128 MiB,
    v7x: 64 MiB per TensorCore).  Falls back to the v7x floor if the query
    is unavailable."""
    cap = 64 * 1024 * 1024
    try:
        info = pltpu.get_tpu_info()
        c = getattr(info, "vmem_capacity_bytes", None)
        if c:
            cap = int(c)
    except Exception:
        pass
    return int(cap * 0.85)


def mlp_forward(x, params, *, input_dim, layers, units, output_dim,
                use_activation=True, row_tile=512, compute_dtype=jnp.bfloat16,
                vmem_limit_bytes=None):
    """Matches MLP.forward: reshape(-1, input_dim) -> fused kernel -> reshape(B, -1, output_dim)."""
    batch = x.shape[0]
    x2 = x.reshape(-1, input_dim)                     # metadata-only reshape, no HBM pass
    n_rows = x2.shape[0]

    if vmem_limit_bytes is None:
        vmem_limit_bytes = _default_vmem_limit_bytes()

    prepared = _prepare_params(params, layers, compute_dtype)

    widths = [w.shape[1] for w in prepared[0::2]]     # padded hidden widths + exact output
    max_w = max([input_dim] + widths)
    weight_bytes = int(sum(w.size * w.dtype.itemsize + b.size * b.dtype.itemsize
                           for w, b in zip(prepared[0::2], prepared[1::2])))
    x_item = jnp.dtype(x.dtype).itemsize
    out_item = jnp.dtype(x.dtype).itemsize

    def vmem_needed(rt):
        io = 2 * rt * input_dim * x_item + 2 * rt * output_dim * out_item  # double-buffered IO
        acts = rt * max_w * 12  # ~2 f32 + bf16 live activation temporaries (conservative)
        return weight_bytes + io + acts

    # --- row tiling ---------------------------------------------------------
    if n_rows <= 8:
        row_tile = n_rows                              # full-extent block
    else:
        # as large as requested, multiple of 8, never larger than the array
        row_tile = max(8, min(_round_up(row_tile, 8), (n_rows // 8) * 8))
        # shrink until the VMEM estimate fits the per-generation budget
        while row_tile > 8 and vmem_needed(row_tile) > vmem_limit_bytes:
            row_tile = max(8, _round_up(row_tile // 2, 8))
        # give the megacore-parallel row axis a few steps when there is enough work
        if n_rows >= 4 * 128:
            row_tile = min(row_tile, max(128, _round_up(-(-n_rows // 4), 8)))

    num_tiles = pl.cdiv(n_rows, row_tile)              # ragged tail handled by Pallas masking

    # --- cost estimate (lets XLA schedule neighbours around the call) --------
    dims = [input_dim] + [units] * layers + [output_dim]
    flops = 2 * n_rows * sum(dims[i] * dims[i + 1] for i in range(len(dims) - 1))
    bytes_accessed = (n_rows * input_dim * x_item + weight_bytes
                      + n_rows * output_dim * out_item)
    cost = pl.CostEstimate(flops=int(flops), transcendentals=0,
                           bytes_accessed=int(bytes_accessed))

    kernel = _make_mlp_kernel(layers, use_activation, compute_dtype)

    in_specs = [pl.BlockSpec((row_tile, input_dim), lambda i: (i, 0))]
    # Weights/biases are constant across the grid: keep them resident in VMEM
    # (no pipelining, no double-buffered weight copies).
    in_specs += [pl.BlockSpec(memory_space=pltpu.MemorySpace.VMEM) for _ in prepared]

    out = pl.pallas_call(
        kernel,
        out_shape=jax.ShapeDtypeStruct((n_rows, output_dim), x.dtype),
        grid=(num_tiles,),
        in_specs=in_specs,
        out_specs=pl.BlockSpec((row_tile, output_dim), lambda i: (i, 0)),
        compiler_params=pltpu.CompilerParams(
            dimension_semantics=("parallel",),
            vmem_limit_bytes=int(vmem_limit_bytes)),
        cost_estimate=cost,
    )(x2, *prepared)

    return out.reshape(batch, -1, output_dim)          # metadata-only reshape


def mlp_reference(x, params, *, input_dim, layers, output_dim,
                  use_activation=True, compute_dtype=None):
    """Plain-JAX reference.  compute_dtype=None -> pure f32 (mirrors torch);
    compute_dtype=bf16 -> same bf16-operand / f32-accumulate math as the kernel."""
    h = x.reshape(-1, input_dim).astype(jnp.float32)

    def linear(h, w, b):
        if compute_dtype is not None:
            return jnp.dot(h.astype(compute_dtype), w.astype(compute_dtype),
                           preferred_element_type=jnp.float32) + b.astype(jnp.float32)
        return h @ w + b

    idx = 0
    for _ in range(layers):
        h = linear(h, params[idx], params[idx + 1])
        idx += 2
        if use_activation:
            h = jnp.maximum(h, 0.0)
    h = linear(h, params[idx], params[idx + 1])
    return h.reshape(x.shape[0], -1, output_dim).astype(x.dtype)


if __name__ == "__main__":
    # Shapes consistent with the module's forward (small demo sizes).
    input_dim, layers, units, output_dim = 32, 2, 64, 16

    key = jax.random.PRNGKey(0)
    kx, kp = jax.random.split(key)
    params = init_mlp_params(kp, input_dim, layers, units, output_dim)

    cases = [
        (2, 8, True, {}),                 # tiny: single grid step, full-extent row block
        (3, 7, True, {}),                 # 21 rows -> ragged tail (masked partial block)
        (4, 128, True, {}),               # 512 rows -> megacore split, grid of 4
        (5, 300, True, {"row_tile": 512}),# 1500 rows -> large tiles + ragged last tile
        (2, 16, False, {}),               # activation=None path (torch default)
    ]
    for batch, seq, act, kw in cases:
        kx, ksub = jax.random.split(kx)
        x = jax.random.normal(ksub, (batch, seq, input_dim), jnp.float32)
        fwd = functools.partial(
            mlp_forward, input_dim=input_dim, layers=layers, units=units,
            output_dim=output_dim, use_activation=act)
        ref = functools.partial(
            mlp_reference, input_dim=input_dim, layers=layers,
            output_dim=output_dim, use_activation=act)

        out = jax.block_until_ready(fwd(x, params, **kw))
        assert out.shape == (batch, seq, output_dim), out.shape
        ref_bf16 = ref(x, params, compute_dtype=jnp.bfloat16)
        ref_f32 = ref(x, params, compute_dtype=None)
        assert jnp.allclose(out, ref_bf16, atol=1e-3, rtol=1e-3), \
            f"mismatch vs bf16 reference for case {(batch, seq, act)}"
        assert jnp.allclose(out, ref_f32, atol=1e-1, rtol=1e-1), \
            f"mismatch vs f32 reference for case {(batch, seq, act)}"

    print("KERNEL_OK")
</pallas_src>

<mosaic_0001>
module attributes {stable_mosaic.version = 11 : i64} {
  func.func @kernel(%arg0: i32, %arg1: memref<16x32xf32, #tpu.memory_space<vmem>>, %arg2: memref<32x128xbf16, #tpu.memory_space<vmem>>, %arg3: memref<1x128xf32, #tpu.memory_space<vmem>>, %arg4: memref<128x128xbf16, #tpu.memory_space<vmem>>, %arg5: memref<1x128xf32, #tpu.memory_space<vmem>>, %arg6: memref<128x16xbf16, #tpu.memory_space<vmem>>, %arg7: memref<1x16xf32, #tpu.memory_space<vmem>>, %arg8: memref<16x16xf32, #tpu.memory_space<vmem>>) attributes {dimension_semantics = [#tpu.dimension_semantics<parallel>], iteration_bounds = array<i64: 1>, scalar_prefetch = 0 : i64, scratch_operands = 0 : i64, tpu.core_type = #tpu.core_type<tc>, window_params = [{transform_indices = @transform_0, window_bounds = array<i64: 16, 32>}, {pipeline_mode = #tpu.pipeline_mode<synchronous>, transform_indices = @transform_1, window_bounds = array<i64: 32, 128>}, {pipeline_mode = #tpu.pipeline_mode<synchronous>, transform_indices = @transform_2, window_bounds = array<i64: 1, 128>}, {pipeline_mode = #tpu.pipeline_mode<synchronous>, transform_indices = @transform_3, window_bounds = array<i64: 128, 128>}, {pipeline_mode = #tpu.pipeline_mode<synchronous>, transform_indices = @transform_4, window_bounds = array<i64: 1, 128>}, {pipeline_mode = #tpu.pipeline_mode<synchronous>, transform_indices = @transform_5, window_bounds = array<i64: 128, 16>}, {pipeline_mode = #tpu.pipeline_mode<synchronous>, transform_indices = @transform_6, window_bounds = array<i64: 1, 16>}, {transform_indices = @transform_7, window_bounds = array<i64: 16, 16>}]} {
    %c0 = arith.constant 0 : index
    %c0_0 = arith.constant 0 : index
    %0 = vector.load %arg1[%c0, %c0_0] : memref<16x32xf32, #tpu.memory_space<vmem>>, vector<16x32xf32>
    %1 = arith.truncf %0 : vector<16x32xf32> to vector<16x32xbf16>
    %c0_1 = arith.constant 0 : index
    %c0_2 = arith.constant 0 : index
    %2 = vector.load %arg2[%c0_1, %c0_2] : memref<32x128xbf16, #tpu.memory_space<vmem>>, vector<32x128xbf16>
    %c0_3 = arith.constant 0 : index
    %c0_4 = arith.constant 0 : index
    %3 = vector.load %arg3[%c0_3, %c0_4] : memref<1x128xf32, #tpu.memory_space<vmem>>, vector<1x128xf32>
    %cst = arith.constant dense<0.000000e+00> : vector<16x128xf32>
    %4 = tpu.matmul %1, %2, %cst {dimension_numbers = #tpu.dot_dimension_numbers<[1], [0], [0], [1], [0, 0, 1, 1], [], []>} : vector<16x32xbf16>, vector<32x128xbf16>, vector<16x128xf32> -> vector<16x128xf32>
    %5 = vector.broadcast %3 : vector<1x128xf32> to vector<16x128xf32>
    %6 = arith.addf %4, %5 : vector<16x128xf32>
    %cst_5 = arith.constant 0.000000e+00 : f32
    %7 = vector.broadcast %cst_5 : f32 to vector<16x128xf32>
    %8 = arith.maximumf %6, %7 : vector<16x128xf32>
    %9 = arith.truncf %8 : vector<16x128xf32> to vector<16x128xbf16>
    %c0_6 = arith.constant 0 : index
    %c0_7 = arith.constant 0 : index
    %10 = vector.load %arg4[%c0_6, %c0_7] : memref<128x128xbf16, #tpu.memory_space<vmem>>, vector<128x128xbf16>
    %c0_8 = arith.constant 0 : index
    %c0_9 = arith.constant 0 : index
    %11 = vector.load %arg5[%c0_8, %c0_9] : memref<1x128xf32, #tpu.memory_space<vmem>>, vector<1x128xf32>
    %cst_10 = arith.constant dense<0.000000e+00> : vector<16x128xf32>
    %12 = tpu.matmul %9, %10, %cst_10 {dimension_numbers = #tpu.dot_dimension_numbers<[1], [0], [0], [1], [0, 0, 1, 1], [], []>} : vector<16x128xbf16>, vector<128x128xbf16>, vector<16x128xf32> -> vector<16x128xf32>
    %13 = vector.broadcast %11 : vector<1x128xf32> to vector<16x128xf32>
    %14 = arith.addf %12, %13 : vector<16x128xf32>
    %cst_11 = arith.constant 0.000000e+00 : f32
    %15 = vector.broadcast %cst_11 : f32 to vector<16x128xf32>
    %16 = arith.maximumf %14, %15 : vector<16x128xf32>
    %17 = arith.truncf %16 : vector<16x128xf32> to vector<16x128xbf16>
    %c0_12 = arith.constant 0 : index
    %c0_13 = arith.constant 0 : index
    %18 = vector.load %arg6[%c0_12, %c0_13] : memref<128x16xbf16, #tpu.memory_space<vmem>>, vector<128x16xbf16>
    %c0_14 = arith.constant 0 : index
    %c0_15 = arith.constant 0 : index
    %19 = vector.load %arg7[%c0_14, %c0_15] : memref<1x16xf32, #tpu.memory_space<vmem>>, vector<1x16xf32>
    %cst_16 = arith.constant dense<0.000000e+00> : vector<16x16xf32>
    %20 = tpu.matmul %17, %18, %cst_16 {dimension_numbers = #tpu.dot_dimension_numbers<[1], [0], [0], [1], [0, 0, 1, 1], [], []>} : vector<16x128xbf16>, vector<128x16xbf16>, vector<16x16xf32> -> vector<16x16xf32>
    %21 = vector.broadcast %19 : vector<1x16xf32> to vector<16x16xf32>
    %22 = arith.addf %20, %21 : vector<16x16xf32>
    %c0_17 = arith.constant 0 : index
    %c0_18 = arith.constant 0 : index
    %23 = vector.load %arg8[%c0_17, %c0_18] : memref<16x16xf32, #tpu.memory_space<vmem>>, vector<16x16xf32>
    tpu.vector_store %arg8[%c0_17, %c0_18], %22 {strides = array<i32>} : memref<16x16xf32, #tpu.memory_space<vmem>>, vector<16x16xf32>,
    return
  }
  func.func @transform_0(%arg0: i32) -> (i32, i32) {
    %c0_i32 = arith.constant 0 : i32
    %c0_i32_0 = arith.constant 0 : i32
    return %arg0, %c0_i32 : i32, i32
  }
  func.func @transform_1(%arg0: i32) -> (i32, i32) {
    %c0_i32 = arith.constant 0 : i32
    %c0_i32_0 = arith.constant 0 : i32
    %c0_i32_1 = arith.constant 0 : i32
    return %c0_i32, %c0_i32_0 : i32, i32
  }
  func.func @transform_2(%arg0: i32) -> (i32, i32) {
    %c0_i32 = arith.constant 0 : i32
    %c0_i32_0 = arith.constant 0 : i32
    %c0_i32_1 = arith.constant 0 : i32
    return %c0_i32, %c0_i32_0 : i32, i32
  }
  func.func @transform_3(%arg0: i32) -> (i32, i32) {
    %c0_i32 = arith.constant 0 : i32
    %c0_i32_0 = arith.constant 0 : i32
    %c0_i32_1 = arith.constant 0 : i32
    return %c0_i32, %c0_i32_0 : i32, i32
  }
  func.func @transform_4(%arg0: i32) -> (i32, i32) {
    %c0_i32 = arith.constant 0 : i32
    %c0_i32_0 = arith.constant 0 : i32
    %c0_i32_1 = arith.constant 0 : i32
    return %c0_i32, %c0_i32_0 : i32, i32
  }
  func.func @transform_5(%arg0: i32) -> (i32, i32) {
    %c0_i32 = arith.constant 0 : i32
    %c0_i32_0 = arith.constant 0 : i32
    %c0_i32_1 = arith.constant 0 : i32
    return %c0_i32, %c0_i32_0 : i32, i32
  }
  func.func @transform_6(%arg0: i32) -> (i32, i32) {
    %c0_i32 = arith.constant 0 : i32
    %c0_i32_0 = arith.constant 0 : i32
    %c0_i32_1 = arith.constant 0 : i32
    return %c0_i32, %c0_i32_0 : i32, i32
  }
  func.func @transform_7(%arg0: i32) -> (i32, i32) {
    %c0_i32 = arith.constant 0 : i32
    %c0_i32_0 = arith.constant 0 : i32
    return %arg0, %c0_i32 : i32, i32
  }
}

</mosaic_0001>

<llo_original>
// kernel: tpu_custom_call.1
$region0: #{tpu_custom_call.1}
  #allocation0 [shape = 'u32[]', space=smem, size = 0x4, offset = 0x4, fixed_abs, tag = 'smem constant byte address 0x4 - core index']
  #allocation1 [shape = 'u32[144,128]{1,0:T(1,128)}', space=vmem, size = 0x12000, scoped, tag = 'internal scratch']
  %s0 = inlined_call_operand.hbm [shape: f32[16,32], index: 0, kind: input, shape index: {}]
  %s1 = inlined_call_operand.hbm [shape: bf16[32,128], index: 1, kind: input, shape index: {}]
  %s2 = inlined_call_operand.vmem [shape: f32[1,128], index: 2, kind: input, shape index: {}]
  %s3 = inlined_call_operand.vmem [shape: bf16[128,128], index: 3, kind: input, shape index: {}]
  %s4 = inlined_call_operand.vmem [shape: f32[1,128], index: 4, kind: input, shape index: {}]
  %s5 = inlined_call_operand.vmem [shape: bf16[128,16], index: 5, kind: input, shape index: {}]
  %s6 = inlined_call_operand.vmem [shape: f32[1,16], index: 6, kind: input, shape index: {}]
  %s7 = inlined_call_operand.hbm [shape: f32[16,16], index: 7, kind: output, shape index: {}]
  %s8 = sld [smem:[#allocation0]]
  $region46: #{tpu_custom_call.1} parent=0
    _
  %s10 = ssub.s32 1, %s8
  %s11 = scalar_select 0, %s10, %s8
  $region1: #{tpu_custom_call.1} parent=0
    #allocation2 [shape = 'u8[8192]{0}', space=vmem, size = 0x2000, scoped, tag = 'input window, operand 0, single buffered']
    #allocation3 [shape = 's32[1]{0}', space=sflag, size = 0x4, scoped, tag = 'scoped memory for tpu_custom_call.1']
    #allocation4 [shape = 's32[1]{0}', space=sflag, size = 0x4, scoped, tag = 'scoped memory for tpu_custom_call.1']
    #allocation5 [shape = 'u8[8192]{0}', space=vmem, size = 0x2000, scoped, tag = 'input window, operand 1, single buffered']
    #allocation6 [shape = 's32[1]{0}', space=sflag, size = 0x4, scoped, tag = 'scoped memory for tpu_custom_call.1']
    #allocation7 [shape = 'u8[8192]{0}', space=vmem, size = 0x2000, scoped, tag = 'output window, operand 0, single buffered']
    %12 = vsyncpa [#allocation3], 0
    %13 = vsyncpa [#allocation6], 0
    %14 = vsyncpa [#allocation4], 0
    // Predicated region
    $region2: #{tpu_custom_call.1} parent=1 // pred_check
      _
    $region3: #{tpu_custom_call.1} parent=1 // pred_check_branch
      %16 = sbr.rel (0) target = $region5
    $region4: #{tpu_custom_call.1} parent=1 // pred_region
      %s18 = ssub.s32 256, 256
      %19 = vsyncadd [#allocation3], %s18
      %s20 = sshll.u32 [#allocation2], 4
      %s21 = int_to_ptr.vmem [resolvable:$true] %s20
      %26 = dma.hbm_to_vmem [thread:$0]  %s0, 256, %s21, [#allocation3], 128, 128, 8
    $region5: #{tpu_custom_call.1} parent=1 // pred_fallthru
      _
    // Predicated region
    $region6: #{tpu_custom_call.1} parent=1 // pred_check
      _
    $region7: #{tpu_custom_call.1} parent=1 // pred_check_branch
      %28 = sbr.rel (0) target = $region9
    $region8: #{tpu_custom_call.1} parent=1 // pred_region
      %s30 = ssub.s32 256, 256
      %31 = vsyncadd [#allocation6], %s30
      %s32 = sshll.u32 [#allocation5], 4
      %s33 = int_to_ptr.vmem [resolvable:$true] %s32
      %38 = dma.hbm_to_vmem [thread:$0]  %s1, 256, %s33, [#allocation6], 64, 64, 4
    $region9: #{tpu_custom_call.1} parent=1 // pred_fallthru
      _
    // Predicated region
    $region10: #{tpu_custom_call.1} parent=1 // pred_check
      _
    $region11: #{tpu_custom_call.1} parent=1 // pred_check_branch
      %40 = sbr.rel (0) target = $region13
    $region12: #{tpu_custom_call.1} parent=1 // pred_region
      _
    $region13: #{tpu_custom_call.1} parent=1 // pred_fallthru
      _
    // Predicated region
    $region14: #{tpu_custom_call.1} parent=1 // pred_check
      _
    $region15: #{tpu_custom_call.1} parent=1 // pred_check_branch
      %42 = sbr.rel (0) target = $region17
    $region16: #{tpu_custom_call.1} parent=1 // pred_region
      _
    $region17: #{tpu_custom_call.1} parent=1 // pred_fallthru
      _
    // Predicated region
    $region18: #{tpu_custom_call.1} parent=1 // pred_check
      _
    $region19: #{tpu_custom_call.1} parent=1 // pred_check_branch
      %44 = sbr.rel (0) target = $region21
    $region20: #{tpu_custom_call.1} parent=1 // pred_region
      _
    $region21: #{tpu_custom_call.1} parent=1 // pred_fallthru
      _
    // Predicated region
    $region22: #{tpu_custom_call.1} parent=1 // pred_check
      _
    $region23: #{tpu_custom_call.1} parent=1 // pred_check_branch
      %46 = sbr.rel (0) target = $region25
    $region24: #{tpu_custom_call.1} parent=1 // pred_region
      _
    $region25: #{tpu_custom_call.1} parent=1 // pred_fallthru
      _
    // Predicated region
    $region26: #{tpu_custom_call.1} parent=1 // pred_check
      _
    $region27: #{tpu_custom_call.1} parent=1 // pred_check_branch
      %48 = sbr.rel (0) target = $region29
    $region28: #{tpu_custom_call.1} parent=1 // pred_region
      _
    $region29: #{tpu_custom_call.1} parent=1 // pred_fallthru
      _
    // Predicated region
    $region30: #{tpu_custom_call.1} parent=1 // pred_check
      _
    $region31: #{tpu_custom_call.1} parent=1 // pred_check_branch
      %50 = sbr.rel (0) target = $region33
    $region32: #{tpu_custom_call.1} parent=1 // pred_region
      %51 = dma.done [#allocation3], 256
    $region33: #{tpu_custom_call.1} parent=1 // pred_fallthru
      _
    // Predicated region
    $region34: #{tpu_custom_call.1} parent=1 // pred_check
      _
    $region35: #{tpu_custom_call.1} parent=1 // pred_check_branch
      %53 = sbr.rel (0) target = $region37
    $region36: #{tpu_custom_call.1} parent=1 // pred_region
      %54 = dma.done [#allocation6], 256
    $region37: #{tpu_custom_call.1} parent=1 // pred_fallthru
      _
    %v56 = vld [vmem:[#allocation2] sm:$0xff]
    %v57 = vld [vmem:[#allocation2 + $0x8] sm:$0xff]
    %v58 = vpack.c.bf16 %v57, %v56
    %v59 = vld [vmem:[#allocation5] sm:$0xf]
    %v60 = vld [vmem:[#allocation5 + $0x4] sm:$0xf]
    %v61 = vld [vmem:[#allocation5 + $0x8] sm:$0xf]
    %v62 = vld [vmem:[#allocation5 + $0xc] sm:$0xf]
    %v63 = vld [vmem:[%s2] sm:$0x1]
    %v65 = vlaneseq
    %v66 = vshrl.u32 %v65, 7
    %v67 = vsub.s32 0, %v66
    %v68 = vrot.slane %v63, %v67
    %v74 = vunpack.c.l.b16 %v59
    %v75 = vunpack.c.l.b16 %v60
    %v76 = vunpack.c.l.b16 %v61
    %v77 = vunpack.c.l.b16 %v62
    %v78 = vpack.c.b16 %v75, %v74
    %v79 = vpack.c.b16 %v77, %v76
    %vm82 = vcmask 261120
    %v84 = vsel %vm82, %v58, 0
    %86 = vmatprep.subr.bf16.mxu0 0
    %87 = vmatpush1.bf16.msra.mxu0 0
    %88 = vmatprep.subr.bf16.mxu0 0
    %89 = vmatpush1.bf16.msra.mxu0 0
    %90 = vmatprep.subr.bf16.mxu0 0
    %91 = vmatpush1.bf16.msra.mxu0 0
    %92 = vmatprep.subr.bf16.mxu0 0
    %93 = vmatpush1.bf16.msra.mxu0 0
    %94 = vmatprep.subr.bf16.mxu0 0
    %95 = vmatpush1.bf16.msra.mxu0 0
    %96 = vmatprep.subr.bf16.mxu0 0
    %97 = vmatpush1.bf16.msra.mxu0 0
    %98 = vmatprep.subr.bf16.mxu0 0
    %99 = vmatpush1.bf16.msra.mxu0 %v79
    %100 = vmatprep.subr.bf16.mxu0 0
    %101 = vmatpush1.bf16.msra.mxu0 %v78
    %102 = vmatprep.subr.bf16.mxu0 0
    %103 = vmatpush2.bf16.msra.mxu0 0
    %104 = vmatprep.subr.bf16.mxu0 0
    %105 = vmatpush2.bf16.msra.mxu0 0
    %106 = vmatprep.subr.bf16.mxu0 0
    %107 = vmatpush2.bf16.msra.mxu0 0
    %108 = vmatprep.subr.bf16.mxu0 0
    %109 = vmatpush2.bf16.msra.mxu0 0
    %110 = vmatprep.subr.bf16.mxu0 0
    %111 = vmatpush2.bf16.msra.mxu0 0
    %112 = vmatprep.subr.bf16.mxu0 0
    %113 = vmatpush2.bf16.msra.mxu0 0
    %114 = vmatprep.subr.bf16.mxu0 0
    %115 = vmatpush2.bf16.msra.mxu0 0
    %116 = vmatprep.subr.bf16.mxu0 0
    %117 = vmatpush2.bf16.msra.mxu0 0
    %118 = vmatprep.mubr.bf16.mxu0 0
    %119 = vmatmul.mubr.bf16.gmra.mxu0 %v84
    %v120 = vpop.f32.mrf.mxu0
    %v121 = vadd.f32 %v68, %v120
    %v122 = vpop.f32.mrf.mxu0
    %v123 = vpop.f32.mrf.mxu0
    %v124 = vadd.f32 %v68, %v123
    %v125 = vpop.f32.mrf.mxu0
    %126 = vdwg.mxu0
    %v127 = vmax.f32 %v121, 0.0
    %v128 = vmax.f32 %v124, 0.0
    %v129 = vpack.c.bf16 %v128, %v127
    %v130 = vld [vmem:[%s3] sm:$0xf]
    %v131 = vld [vmem:[%s3 + $0x4] sm:$0xf]
    %v132 = vld [vmem:[%s3 + $0x8] sm:$0xf]
    %v133 = vld [vmem:[%s3 + $0xc] sm:$0xf]
    %v134 = vld [vmem:[%s3 + $0x10] sm:$0xf]
    %v135 = vld [vmem:[%s3 + $0x14] sm:$0xf]
    %v136 = vld [vmem:[%s3 + $0x18] sm:$0xf]
    %v137 = vld [vmem:[%s3 + $0x1c] sm:$0xf]
    %v138 = vld [vmem:[%s3 + $0x20] sm:$0xf]
    %v139 = vld [vmem:[%s3 + $0x24] sm:$0xf]
    %v140 = vld [vmem:[%s3 + $0x28] sm:$0xf]
    %v141 = vld [vmem:[%s3 + $0x2c] sm:$0xf]
    %v142 = vld [vmem:[%s3 + $0x30] sm:$0xf]
    %v143 = vld [vmem:[%s3 + $0x34] sm:$0xf]
    %v144 = vld [vmem:[%s3 + $0x38] sm:$0xf]
    %v145 = vld [vmem:[%s3 + $0x3c] sm:$0xf]
    %v146 = vld [vmem:[%s4] sm:$0x1]
    %v148 = vlaneseq
    %v149 = vshrl.u32 %v148, 7
    %v150 = vsub.s32 0, %v149
    %v151 = vrot.slane %v146, %v150
    %v169 = vunpack.c.l.b16 %v130
    %v170 = vunpack.c.l.b16 %v131
    %v171 = vunpack.c.l.b16 %v132
    %v172 = vunpack.c.l.b16 %v133
    %v173 = vunpack.c.l.b16 %v134
    %v174 = vunpack.c.l.b16 %v135
    %v175 = vunpack.c.l.b16 %v136
    %v176 = vunpack.c.l.b16 %v137
    %v177 = vunpack.c.l.b16 %v138
    %v178 = vunpack.c.l.b16 %v139
    %v179 = vunpack.c.l.b16 %v140
    %v180 = vunpack.c.l.b16 %v141
    %v181 = vunpack.c.l.b16 %v142
    %v182 = vunpack.c.l.b16 %v143
    %v183 = vunpack.c.l.b16 %v144
    %v184 = vunpack.c.l.b16 %v145
    %v185 = vpack.c.b16 %v170, %v169
    %v186 = vpack.c.b16 %v172, %v171
    %v187 = vpack.c.b16 %v174, %v173
    %v188 = vpack.c.b16 %v176, %v175
    %v189 = vpack.c.b16 %v178, %v177
    %v190 = vpack.c.b16 %v180, %v179
    %v191 = vpack.c.b16 %v182, %v181
    %v192 = vpack.c.b16 %v184, %v183
    %201 = vmatprep.subr.bf16.mxu0 0
    %202 = vmatpush1.bf16.msra.mxu0 %v192
    %203 = vmatprep.subr.bf16.mxu0 0
    %204 = vmatpush1.bf16.msra.mxu0 %v191
    %205 = vmatprep.subr.bf16.mxu0 0
    %206 = vmatpush1.bf16.msra.mxu0 %v190
    %207 = vmatprep.subr.bf16.mxu0 0
    %208 = vmatpush1.bf16.msra.mxu0 %v189
    %209 = vmatprep.subr.bf16.mxu0 0
    %210 = vmatpush1.bf16.msra.mxu0 %v188
    %211 = vmatprep.subr.bf16.mxu0 0
    %212 = vmatpush1.bf16.msra.mxu0 %v187
    %213 = vmatprep.subr.bf16.mxu0 0
    %214 = vmatpush1.bf16.msra.mxu0 %v186
    %215 = vmatprep.subr.bf16.mxu0 0
    %216 = vmatpush1.bf16.msra.mxu0 %v185
    %217 = vmatprep.subr.bf16.mxu0 0
    %218 = vmatpush2.bf16.msra.mxu0 0
    %219 = vmatprep.subr.bf16.mxu0 0
    %220 = vmatpush2.bf16.msra.mxu0 0
    %221 = vmatprep.subr.bf16.mxu0 0
    %222 = vmatpush2.bf16.msra.mxu0 0
    %223 = vmatprep.subr.bf16.mxu0 0
    %224 = vmatpush2.bf16.msra.mxu0 0
    %225 = vmatprep.subr.bf16.mxu0 0
    %226 = vmatpush2.bf16.msra.mxu0 0
    %227 = vmatprep.subr.bf16.mxu0 0
    %228 = vmatpush2.bf16.msra.mxu0 0
    %229 = vmatprep.subr.bf16.mxu0 0
    %230 = vmatpush2.bf16.msra.mxu0 0
    %231 = vmatprep.subr.bf16.mxu0 0
    %232 = vmatpush2.bf16.msra.mxu0 0
    %233 = vmatprep.mubr.bf16.mxu0 0
    %234 = vmatmul.mubr.bf16.gmra.mxu0 %v129
    %v235 = vpop.f32.mrf.mxu0
    %v236 = vadd.f32 %v151, %v235
    %v237 = vpop.f32.mrf.mxu0
    %v238 = vpop.f32.mrf.mxu0
    %v239 = vadd.f32 %v151, %v238
    %v240 = vpop.f32.mrf.mxu0
    %241 = vdwg.mxu0
    %v242 = vmax.f32 %v236, 0.0
    %v243 = vmax.f32 %v239, 0.0
    %v244 = vpack.c.bf16 %v243, %v242
    %v245 = vld [vmem:[%s5] sm:$0xf]
    %v246 = vld [vmem:[%s5 + $0x4] sm:$0xf]
    %v247 = vld [vmem:[%s5 + $0x8] sm:$0xf]
    %v248 = vld [vmem:[%s5 + $0xc] sm:$0xf]
    %v249 = vld [vmem:[%s5 + $0x10] sm:$0xf]
    %v250 = vld [vmem:[%s5 + $0x14] sm:$0xf]
    %v251 = vld [vmem:[%s5 + $0x18] sm:$0xf]
    %v252 = vld [vmem:[%s5 + $0x1c] sm:$0xf]
    %v253 = vld [vmem:[%s5 + $0x20] sm:$0xf]
    %v254 = vld [vmem:[%s5 + $0x24] sm:$0xf]
    %v255 = vld [vmem:[%s5 + $0x28] sm:$0xf]
    %v256 = vld [vmem:[%s5 + $0x2c] sm:$0xf]
    %v257 = vld [vmem:[%s5 + $0x30] sm:$0xf]
    %v258 = vld [vmem:[%s5 + $0x34] sm:$0xf]
    %v259 = vld [vmem:[%s5 + $0x38] sm:$0xf]
    %v260 = vld [vmem:[%s5 + $0x3c] sm:$0xf]
    %v261 = vld [vmem:[%s6] sm:$0x1]
    %v263 = vlaneseq
    %v264 = vshrl.u32 %v263, 7
    %v265 = vsub.s32 0, %v264
    %v266 = vrot.slane %v261, %v265
    %v284 = vunpack.c.l.b16 %v245
    %v285 = vunpack.c.l.b16 %v246
    %v286 = vunpack.c.l.b16 %v247
    %v287 = vunpack.c.l.b16 %v248
    %v288 = vunpack.c.l.b16 %v249
    %v289 = vunpack.c.l.b16 %v250
    %v290 = vunpack.c.l.b16 %v251
    %v291 = vunpack.c.l.b16 %v252
    %v292 = vunpack.c.l.b16 %v253
    %v293 = vunpack.c.l.b16 %v254
    %v294 = vunpack.c.l.b16 %v255
    %v295 = vunpack.c.l.b16 %v256
    %v296 = vunpack.c.l.b16 %v257
    %v297 = vunpack.c.l.b16 %v258
    %v298 = vunpack.c.l.b16 %v259
    %v299 = vunpack.c.l.b16 %v260
    %v300 = vpack.c.b16 %v285, %v284
    %v301 = vpack.c.b16 %v287, %v286
    %v302 = vpack.c.b16 %v289, %v288
    %v303 = vpack.c.b16 %v291, %v290
    %v304 = vpack.c.b16 %v293, %v292
    %v305 = vpack.c.b16 %v295, %v294
    %v306 = vpack.c.b16 %v297, %v296
    %v307 = vpack.c.b16 %v299, %v298
    %316 = vmatprep.subr.bf16.mxu0 0
    %317 = vmatpush1.bf16.msra.mxu0 %v307
    %318 = vmatprep.subr.bf16.mxu0 0
    %319 = vmatpush1.bf16.msra.mxu0 %v306
    %320 = vmatprep.subr.bf16.mxu0 0
    %321 = vmatpush1.bf16.msra.mxu0 %v305
    %322 = vmatprep.subr.bf16.mxu0 0
    %323 = vmatpush1.bf16.msra.mxu0 %v304
    %324 = vmatprep.subr.bf16.mxu0 0
    %325 = vmatpush1.bf16.msra.mxu0 %v303
    %326 = vmatprep.subr.bf16.mxu0 0
    %327 = vmatpush1.bf16.msra.mxu0 %v302
    %328 = vmatprep.subr.bf16.mxu0 0
    %329 = vmatpush1.bf16.msra.mxu0 %v301
    %330 = vmatprep.subr.bf16.mxu0 0
    %331 = vmatpush1.bf16.msra.mxu0 %v300
    %332 = vmatprep.subr.bf16.mxu0 0
    %333 = vmatpush2.bf16.msra.mxu0 0
    %334 = vmatprep.subr.bf16.mxu0 0
    %335 = vmatpush2.bf16.msra.mxu0 0
    %336 = vmatprep.subr.bf16.mxu0 0
    %337 = vmatpush2.bf16.msra.mxu0 0
    %338 = vmatprep.subr.bf16.mxu0 0
    %339 = vmatpush2.bf16.msra.mxu0 0
    %340 = vmatprep.subr.bf16.mxu0 0
    %341 = vmatpush2.bf16.msra.mxu0 0
    %342 = vmatprep.subr.bf16.mxu0 0
    %343 = vmatpush2.bf16.msra.mxu0 0
    %344 = vmatprep.subr.bf16.mxu0 0
    %345 = vmatpush2.bf16.msra.mxu0 0
    %346 = vmatprep.subr.bf16.mxu0 0
    %347 = vmatpush2.bf16.msra.mxu0 0
    %348 = vmatprep.mubr.bf16.mxu0 0
    %349 = vmatmul.mubr.bf16.gmra.mxu0 %v244
    %v350 = vpop.f32.mrf.mxu0
    %v351 = vadd.f32 %v266, %v350
    %v352 = vpop.f32.mrf.mxu0
    %v353 = vpop.f32.mrf.mxu0
    %v354 = vadd.f32 %v266, %v353
    %v355 = vpop.f32.mrf.mxu0
    %356 = vdwg.mxu0
    %vm357 = vcmask 130048
    %358 = vst.msk [vmem:[#allocation7] sm:$0xff] %vm357, %v351
    %359 = vst.msk [vmem:[#allocation7 + $0x8] sm:$0xff] %vm357, %v354
    // Predicated region
    $region38: #{tpu_custom_call.1} parent=1 // pred_check
      _
    $region39: #{tpu_custom_call.1} parent=1 // pred_check_branch
      %361 = sbr.rel (0) target = $region41
    $region40: #{tpu_custom_call.1} parent=1 // pred_region
      %s363 = ssub.s32 256, 256
      %364 = vsyncadd [#allocation4], %s363
      %s365 = sshll.u32 [#allocation7], 4
      %s366 = int_to_ptr.vmem [resolvable:$true] %s365
      %371 = dma.vmem_to_hbm [thread:$0]  %s366, 256, %s7, [#allocation4], 128, 128, 8
    $region41: #{tpu_custom_call.1} parent=1 // pred_fallthru
      _
    // Predicated region
    $region42: #{tpu_custom_call.1} parent=1 // pred_check
      _
    $region43: #{tpu_custom_call.1} parent=1 // pred_check_branch
      %373 = sbr.rel (0) target = $region45
    $region44: #{tpu_custom_call.1} parent=1 // pred_region
      %374 = dma.done [#allocation4], 256
    $region45: #{tpu_custom_call.1} parent=1 // pred_fallthru
      _
    %375 = vsyncpa [#allocation3], 1
    %376 = vsyncpa [#allocation6], 1
    %377 = vsyncpa [#allocation4], 1

</llo_original>
